<compile_context>
chip_gen: v6e
topology: v6e:2x2x1
jax: 0.10.0
libtpu: 0.0.40
codegen_flags: <defaults>
</compile_context>

<pallas_src>
import functools

import jax
import jax.numpy as jnp
from jax import lax
from jax.experimental import pallas as pl
from jax.experimental.pallas import tpu as pltpu

EPS = 1e-5  # nn.BatchNorm2d default eps


# --------------------------------------------------------------------------
# In-kernel helpers
# --------------------------------------------------------------------------
def _fold_bn(stat_sums, count, gamma, beta):
    """stat_sums: (2, C) f32 [sum, sum_sq] -> per-channel scale/shift (1, C)."""
    inv_n = 1.0 / count
    mu = stat_sums[0:1, :] * inv_n
    var = jnp.maximum(stat_sums[1:2, :] * inv_n - mu * mu, 0.0)
    s = gamma * lax.rsqrt(var + EPS)
    t = beta - mu * s
    return s, t


def _partial_stats(y):
    """y: (rows, C) f32 -> (2, C) [sum, sum_sq] partial statistics."""
    return jnp.concatenate(
        [jnp.sum(y, axis=0, keepdims=True),
         jnp.sum(y * y, axis=0, keepdims=True)], axis=0)


# --------------------------------------------------------------------------
# Pass 1: conv1 (1x1) -> H-padded bf16 y1 + f32 partial stats
# --------------------------------------------------------------------------
def _conv1_kernel(x_ref, w1_ref, y1p_ref, st1_ref):
    _, hh, ww, cin = x_ref.shape
    p = w1_ref.shape[1]
    rows = hh * ww
    x = x_ref[...].reshape(rows, cin).astype(jnp.bfloat16)
    y = jnp.dot(x, w1_ref[...], preferred_element_type=jnp.float32)   # f32
    st1_ref[...] = _partial_stats(y).reshape(1, 2, p)
    y1p_ref[0, 1:hh + 1, :, :] = y.astype(jnp.bfloat16).reshape(hh, ww, p)
    # Zero halo rows (their contributions are also masked in pass 2).
    y1p_ref[0, 0:1, :, :] = jnp.zeros((1, ww, p), jnp.bfloat16)
    y1p_ref[0, hh + 1:hh + 2, :, :] = jnp.zeros((1, ww, p), jnp.bfloat16)


# --------------------------------------------------------------------------
# Pass 2: BN1+ReLU fold, conv2 (3x3, pad 1) per row-tile with 1-row halo
# --------------------------------------------------------------------------
def _conv2_kernel(y1p_ref, st1_ref, g1_ref, b1_ref, w2_ref,
                  y2_ref, st2_ref, patches_ref, *, count, hh, ww, th):
    p = g1_ref.shape[1]
    rows = th * ww
    win_rows = (th + 2) * ww
    j = pl.program_id(1)

    # Finalize BN1 from per-image partial sums (tiny (2, P) math).
    st = jnp.sum(st1_ref[...].reshape(-1, 2, p), axis=0)
    s1, t1 = _fold_bn(st, count, g1_ref[...], b1_ref[...])

    # (th + 2)-row window out of the zero-padded image (halo row each side).
    row0 = pl.multiple_of(j * th, th)
    win = y1p_ref[0, pl.ds(row0, th + 2), :, :].astype(jnp.float32)
    a = jnp.maximum(win.reshape(win_rows, p) * s1 + t1, 0.0)          # f32

    # Absolute output coordinates of this row tile (for edge masking).
    h_idx = (j * th +
             lax.broadcasted_iota(jnp.int32, (th, ww, 1), 0).reshape(rows, 1))
    w_idx = lax.broadcasted_iota(jnp.int32, (th, ww, 1), 1).reshape(rows, 1)

    # Nine shifted taps, written directly into the bf16 patch scratch.
    k = 0
    for dy in (-1, 0, 1):
        for dx in (-1, 0, 1):
            off = dy * ww + dx
            shifted = a if off == 0 else pltpu.roll(a, (-off) % win_rows, axis=0)
            tap = shifted[ww:ww + rows, :]              # central th rows
            valid = ((h_idx + dy >= 0) & (h_idx + dy < hh) &
                     (w_idx + dx >= 0) & (w_idx + dx < ww))
            patches_ref[:, k * p:(k + 1) * p] = (
                jnp.where(valid, tap, 0.0).astype(jnp.bfloat16))
            k += 1

    y = jnp.dot(patches_ref[...], w2_ref[...],
                preferred_element_type=jnp.float32)
    y2_ref[...] = y.astype(jnp.bfloat16).reshape(1, th, ww, p)
    st2_ref[...] = _partial_stats(y).reshape(1, 1, 2, p)


# --------------------------------------------------------------------------
# Pass 3: BN2+ReLU fold, conv3 (1x1) + partial stats of y3
# --------------------------------------------------------------------------
def _conv3_kernel(y2_ref, st2_ref, g2_ref, b2_ref, w3_ref,
                  y3_ref, st3_ref, *, count):
    _, th, ww, p = y2_ref.shape
    cout = w3_ref.shape[1]
    rows = th * ww
    st = jnp.sum(st2_ref[...].reshape(-1, 2, p), axis=0)
    s2, t2 = _fold_bn(st, count, g2_ref[...], b2_ref[...])
    a = jnp.maximum(
        y2_ref[...].astype(jnp.float32).reshape(rows, p) * s2 + t2, 0.0)
    y = jnp.dot(a.astype(jnp.bfloat16), w3_ref[...],
                preferred_element_type=jnp.float32)
    y3_ref[...] = y.astype(jnp.bfloat16).reshape(1, th, ww, cout)
    st3_ref[...] = _partial_stats(y).reshape(1, 1, 2, cout)


# --------------------------------------------------------------------------
# Pass 4: BN3 fold + identity residual + ReLU
# --------------------------------------------------------------------------
def _bn3_res_kernel(y3_ref, x_ref, st3_ref, g3_ref, b3_ref, out_ref, *, count):
    _, th, ww, c = y3_ref.shape
    rows = th * ww
    st = jnp.sum(st3_ref[...].reshape(-1, 2, c), axis=0)
    s3, t3 = _fold_bn(st, count, g3_ref[...], b3_ref[...])
    y = y3_ref[...].astype(jnp.float32).reshape(rows, c) * s3 + t3
    res = x_ref[...].reshape(rows, c)   # identity shortcut, read here only
    out_ref[...] = jnp.maximum(y + res, 0.0).reshape(1, th, ww, c)


# --------------------------------------------------------------------------
# Wrapper helpers
# --------------------------------------------------------------------------
def _vmem_limit_bytes():
    # v5e/v6e: 128 MiB physical -> use ~half; v7x: 64 MiB -> ~32 MiB.
    try:
        cap = int(pltpu.get_tpu_info().vmem_capacity_bytes)
        return max(32 * 1024 * 1024, min(cap // 2, 96 * 1024 * 1024))
    except Exception:
        return 32 * 1024 * 1024


def _pick_row_tile(hh, ww, target_rows=1024):
    """Largest divisor th of hh with th*ww <= target_rows (else 1)."""
    cands = [t for t in range(1, hh + 1) if hh % t == 0 and t * ww <= target_rows]
    return max(cands) if cands else 1


# --------------------------------------------------------------------------
# Wrapper
# --------------------------------------------------------------------------
def bottleneck_forward(x_nchw, params, *, row_tile=None):
    """x_nchw: (N, Cin, H, W) f32; params in PyTorch layouts."""
    w1, g1, b1, w2, g2, b2, w3, g3, b3 = params
    n, cin, hh, ww = x_nchw.shape
    p = w1.shape[0]
    cout = w3.shape[0]
    assert cin == cout, "identity residual requires inplanes == planes * 4"

    th = row_tile if row_tile is not None else _pick_row_tile(hh, ww)
    assert hh % th == 0
    gh = hh // th
    nhw = float(n * hh * ww)
    vmem = _vmem_limit_bytes()
    cp1 = pltpu.CompilerParams(dimension_semantics=("parallel",),
                               vmem_limit_bytes=vmem)
    cp2 = pltpu.CompilerParams(dimension_semantics=("parallel", "parallel"),
                               vmem_limit_bytes=vmem)

    # ---- layout / dtype prep only (all compute stays inside the kernels) ---
    x = jnp.transpose(x_nchw, (0, 2, 3, 1))                              # NHWC
    w1m = jnp.transpose(w1[:, :, 0, 0], (1, 0)).astype(jnp.bfloat16)     # (Cin,P)
    w2m = jnp.transpose(w2, (2, 3, 1, 0)).reshape(9 * p, p).astype(jnp.bfloat16)
    w3m = jnp.transpose(w3[:, :, 0, 0], (1, 0)).astype(jnp.bfloat16)     # (P,Cout)
    g1r, b1r = g1.reshape(1, p), b1.reshape(1, p)
    g2r, b2r = g2.reshape(1, p), b2.reshape(1, p)
    g3r, b3r = g3.reshape(1, cout), b3.reshape(1, cout)

    # ---- pass 1: conv1 (1x1) -> H-padded bf16 y1 ----
    y1p, st1 = pl.pallas_call(
        _conv1_kernel,
        grid=(n,),
        in_specs=[
            pl.BlockSpec((1, hh, ww, cin), lambda i: (i, 0, 0, 0)),
            pl.BlockSpec((cin, p), lambda i: (0, 0)),
        ],
        out_specs=(
            pl.BlockSpec((1, hh + 2, ww, p), lambda i: (i, 0, 0, 0)),
            pl.BlockSpec((1, 2, p), lambda i: (i, 0, 0)),
        ),
        out_shape=(
            jax.ShapeDtypeStruct((n, hh + 2, ww, p), jnp.bfloat16),
            jax.ShapeDtypeStruct((n, 2, p), jnp.float32),
        ),
        compiler_params=cp1,
        cost_estimate=pl.CostEstimate(
            flops=2 * n * hh * ww * cin * p, transcendentals=0,
            bytes_accessed=4 * n * hh * ww * cin + 2 * n * (hh + 2) * ww * p
            + 2 * cin * p),
    )(x, w1m)

    # ---- pass 2: BN1+ReLU + conv2 (3x3, pad 1), row-tiled with 1-row halo --
    y2, st2 = pl.pallas_call(
        functools.partial(_conv2_kernel, count=nhw, hh=hh, ww=ww, th=th),
        grid=(n, gh),
        in_specs=[
            pl.BlockSpec((1, hh + 2, ww, p), lambda i, j: (i, 0, 0, 0)),
            pl.BlockSpec((n, 2, p), lambda i, j: (0, 0, 0)),
            pl.BlockSpec((1, p), lambda i, j: (0, 0)),
            pl.BlockSpec((1, p), lambda i, j: (0, 0)),
            pl.BlockSpec((9 * p, p), lambda i, j: (0, 0)),
        ],
        out_specs=(
            pl.BlockSpec((1, th, ww, p), lambda i, j: (i, j, 0, 0)),
            pl.BlockSpec((1, 1, 2, p), lambda i, j: (i, j, 0, 0)),
        ),
        out_shape=(
            jax.ShapeDtypeStruct((n, hh, ww, p), jnp.bfloat16),
            jax.ShapeDtypeStruct((n, gh, 2, p), jnp.float32),
        ),
        scratch_shapes=[pltpu.VMEM((th * ww, 9 * p), jnp.bfloat16)],
        compiler_params=cp2,
        cost_estimate=pl.CostEstimate(
            flops=2 * n * hh * ww * 9 * p * p, transcendentals=0,
            bytes_accessed=2 * n * (hh + 2) * ww * p + 2 * n * hh * ww * p
            + 2 * 9 * p * p),
    )(y1p, st1, g1r, b1r, w2m)

    # ---- pass 3: BN2+ReLU + conv3 (1x1) ----
    y3, st3 = pl.pallas_call(
        functools.partial(_conv3_kernel, count=nhw),
        grid=(n, gh),
        in_specs=[
            pl.BlockSpec((1, th, ww, p), lambda i, j: (i, j, 0, 0)),
            pl.BlockSpec((n, gh, 2, p), lambda i, j: (0, 0, 0, 0)),
            pl.BlockSpec((1, p), lambda i, j: (0, 0)),
            pl.BlockSpec((1, p), lambda i, j: (0, 0)),
            pl.BlockSpec((p, cout), lambda i, j: (0, 0)),
        ],
        out_specs=(
            pl.BlockSpec((1, th, ww, cout), lambda i, j: (i, j, 0, 0)),
            pl.BlockSpec((1, 1, 2, cout), lambda i, j: (i, j, 0, 0)),
        ),
        out_shape=(
            jax.ShapeDtypeStruct((n, hh, ww, cout), jnp.bfloat16),
            jax.ShapeDtypeStruct((n, gh, 2, cout), jnp.float32),
        ),
        compiler_params=cp2,
        cost_estimate=pl.CostEstimate(
            flops=2 * n * hh * ww * p * cout, transcendentals=0,
            bytes_accessed=2 * n * hh * ww * (p + cout) + 2 * p * cout),
    )(y2, st2, g2r, b2r, w3m)

    # ---- pass 4: BN3 + identity residual + ReLU ----
    out_nhwc = pl.pallas_call(
        functools.partial(_bn3_res_kernel, count=nhw),
        grid=(n, gh),
        in_specs=[
            pl.BlockSpec((1, th, ww, cout), lambda i, j: (i, j, 0, 0)),
            pl.BlockSpec((1, th, ww, cin), lambda i, j: (i, j, 0, 0)),
            pl.BlockSpec((n, gh, 2, cout), lambda i, j: (0, 0, 0, 0)),
            pl.BlockSpec((1, cout), lambda i, j: (0, 0)),
            pl.BlockSpec((1, cout), lambda i, j: (0, 0)),
        ],
        out_specs=pl.BlockSpec((1, th, ww, cout), lambda i, j: (i, j, 0, 0)),
        out_shape=jax.ShapeDtypeStruct((n, hh, ww, cout), jnp.float32),
        compiler_params=cp2,
        cost_estimate=pl.CostEstimate(
            flops=3 * n * hh * ww * cout, transcendentals=0,
            bytes_accessed=n * hh * ww * cout * (2 + 4 + 4)),
    )(y3, x, st3, g3r, b3r)

    return jnp.transpose(out_nhwc, (0, 3, 1, 2))


# --------------------------------------------------------------------------
# Pure-JAX f32 reference mirroring the PyTorch forward (NCHW)
# --------------------------------------------------------------------------
def reference_forward(x, params):
    w1, g1, b1, w2, g2, b2, w3, g3, b3 = params

    def conv(x, w, pad=0):
        return lax.conv_general_dilated(
            x, w, window_strides=(1, 1), padding=[(pad, pad), (pad, pad)],
            dimension_numbers=('NCHW', 'OIHW', 'NCHW'),
            precision=lax.Precision.HIGHEST)

    def bn(y, g, b):
        mu = jnp.mean(y, axis=(0, 2, 3), keepdims=True)
        var = jnp.mean((y - mu) ** 2, axis=(0, 2, 3), keepdims=True)
        return ((y - mu) / jnp.sqrt(var + EPS)) * g.reshape(1, -1, 1, 1) \
            + b.reshape(1, -1, 1, 1)

    out = jax.nn.relu(bn(conv(x, w1), g1, b1))
    out = jax.nn.relu(bn(conv(out, w2, pad=1), g2, b2))
    out = bn(conv(out, w3), g3, b3)
    return jax.nn.relu(out + x)


if __name__ == "__main__":
    key = jax.random.PRNGKey(0)
    N, inplanes, planes, H, W = 2, 16, 4, 16, 16   # inplanes == planes*4
    Cout = planes * 4
    ks = jax.random.split(key, 10)

    x = jax.random.normal(ks[0], (N, inplanes, H, W), jnp.float32)
    w1 = 0.1 * jax.random.normal(ks[1], (planes, inplanes, 1, 1), jnp.float32)
    w2 = 0.1 * jax.random.normal(ks[2], (planes, planes, 3, 3), jnp.float32)
    w3 = 0.1 * jax.random.normal(ks[3], (Cout, planes, 1, 1), jnp.float32)
    g1 = 1.0 + 0.1 * jax.random.normal(ks[4], (planes,), jnp.float32)
    b1 = 0.1 * jax.random.normal(ks[5], (planes,), jnp.float32)
    g2 = 1.0 + 0.1 * jax.random.normal(ks[6], (planes,), jnp.float32)
    b2 = 0.1 * jax.random.normal(ks[7], (planes,), jnp.float32)
    g3 = 1.0 + 0.1 * jax.random.normal(ks[8], (Cout,), jnp.float32)
    b3 = 0.1 * jax.random.normal(ks[9], (Cout,), jnp.float32)
    params = (w1, g1, b1, w2, g2, b2, w3, g3, b3)

    out = bottleneck_forward(x, params)
    out = jax.block_until_ready(out)
    assert out.shape == (N, Cout, H, W), out.shape

    ref = reference_forward(x, params)
    err = float(jnp.max(jnp.abs(out - ref)))
    # bf16 MXU operands + bf16 inter-pass activations (f32 accumulation and
    # f32 BN statistics) per the performance guidance; tolerance sized
    # accordingly.
    assert err < 5e-2, f"max abs err {err}"

    print("KERNEL_OK")
</pallas_src>

<mosaic_0001>
module attributes {stable_mosaic.version = 11 : i64} {
  func.func @_conv1_kernel(%arg0: i32, %arg1: memref<1x16x16x16xf32, #tpu.memory_space<vmem>>, %arg2: memref<16x4xbf16, #tpu.memory_space<vmem>>, %arg3: memref<1x18x16x4xbf16, #tpu.memory_space<vmem>>, %arg4: memref<1x2x4xf32, #tpu.memory_space<vmem>>) attributes {dimension_semantics = [#tpu.dimension_semantics<parallel>], iteration_bounds = array<i64: 2>, scalar_prefetch = 0 : i64, scratch_operands = 0 : i64, tpu.core_type = #tpu.core_type<tc>, window_params = [{transform_indices = @transform_0, window_bounds = array<i64: 1, 16, 16, 16>}, {pipeline_mode = #tpu.pipeline_mode<synchronous>, transform_indices = @transform_1, window_bounds = array<i64: 16, 4>}, {transform_indices = @transform_2, window_bounds = array<i64: 1, 18, 16, 4>}, {transform_indices = @transform_3, window_bounds = array<i64: 1, 2, 4>}]} {
    %c0 = arith.constant 0 : index
    %c0_0 = arith.constant 0 : index
    %c0_1 = arith.constant 0 : index
    %c0_2 = arith.constant 0 : index
    %0 = vector.load %arg1[%c0, %c0_0, %c0_1, %c0_2] : memref<1x16x16x16xf32, #tpu.memory_space<vmem>>, vector<1x16x16x16xf32>
    %1 = vector.shape_cast %0 : vector<1x16x16x16xf32> to vector<256x16xf32>
    %2 = arith.truncf %1 : vector<256x16xf32> to vector<256x16xbf16>
    %c0_3 = arith.constant 0 : index
    %c0_4 = arith.constant 0 : index
    %3 = vector.load %arg2[%c0_3, %c0_4] : memref<16x4xbf16, #tpu.memory_space<vmem>>, vector<16x4xbf16>
    %cst = arith.constant dense<0.000000e+00> : vector<256x4xf32>
    %4 = tpu.matmul %2, %3, %cst {dimension_numbers = #tpu.dot_dimension_numbers<[1], [0], [0], [1], [0, 0, 1, 1], [], []>} : vector<256x16xbf16>, vector<16x4xbf16>, vector<256x4xf32> -> vector<256x4xf32>
    %cst_5 = arith.constant dense<0.000000e+00> : vector<4xf32>
    %5 = vector.multi_reduction <add>, %4, %cst_5 [0] : vector<256x4xf32> to vector<4xf32>
    %6 = vector.shape_cast %5 : vector<4xf32> to vector<1x4xf32>
    %7 = arith.mulf %4, %4 : vector<256x4xf32>
    %cst_6 = arith.constant dense<0.000000e+00> : vector<4xf32>
    %8 = vector.multi_reduction <add>, %7, %cst_6 [0] : vector<256x4xf32> to vector<4xf32>
    %9 = vector.shape_cast %8 : vector<4xf32> to vector<1x4xf32>
    %10 = tpu.concatenate %6, %9 in 0 : vector<1x4xf32>, vector<1x4xf32> -> vector<2x4xf32>
    %11 = vector.shape_cast %10 : vector<2x4xf32> to vector<1x2x4xf32>
    %c0_7 = arith.constant 0 : index
    %c0_8 = arith.constant 0 : index
    %c0_9 = arith.constant 0 : index
    %12 = vector.load %arg4[%c0_7, %c0_8, %c0_9] : memref<1x2x4xf32, #tpu.memory_space<vmem>>, vector<1x2x4xf32>
    tpu.vector_store %arg4[%c0_7, %c0_8, %c0_9], %11 {strides = array<i32>} : memref<1x2x4xf32, #tpu.memory_space<vmem>>, vector<1x2x4xf32>,
    %13 = arith.truncf %4 : vector<256x4xf32> to vector<256x4xbf16>
    %14 = vector.shape_cast %13 : vector<256x4xbf16> to vector<16x16x4xbf16>
    %c0_10 = arith.constant 0 : index
    %c1 = arith.constant 1 : index
    %c0_11 = arith.constant 0 : index
    %c0_12 = arith.constant 0 : index
    %15 = vector.load %arg3[%c0_10, %c1, %c0_11, %c0_12] : memref<1x18x16x4xbf16, #tpu.memory_space<vmem>>, vector<1x16x16x4xbf16>
    %16 = vector.shape_cast %15 : vector<1x16x16x4xbf16> to vector<16x16x4xbf16>
    %17 = vector.shape_cast %14 : vector<16x16x4xbf16> to vector<1x16x16x4xbf16>
    tpu.vector_store %arg3[%c0_10, %c1, %c0_11, %c0_12], %17 {strides = array<i32>} : memref<1x18x16x4xbf16, #tpu.memory_space<vmem>>, vector<1x16x16x4xbf16>,
    %cst_13 = arith.constant 0.000000e+00 : bf16
    %18 = vector.broadcast %cst_13 : bf16 to vector<1x16x4xbf16>
    %c0_14 = arith.constant 0 : index
    %c0_15 = arith.constant 0 : index
    %c0_16 = arith.constant 0 : index
    %c0_17 = arith.constant 0 : index
    %19 = vector.load %arg3[%c0_14, %c0_15, %c0_16, %c0_17] : memref<1x18x16x4xbf16, #tpu.memory_space<vmem>>, vector<1x1x16x4xbf16>
    %20 = vector.shape_cast %19 : vector<1x1x16x4xbf16> to vector<1x16x4xbf16>
    %21 = vector.shape_cast %18 : vector<1x16x4xbf16> to vector<1x1x16x4xbf16>
    tpu.vector_store %arg3[%c0_14, %c0_15, %c0_16, %c0_17], %21 {strides = array<i32>} : memref<1x18x16x4xbf16, #tpu.memory_space<vmem>>, vector<1x1x16x4xbf16>,
    %cst_18 = arith.constant 0.000000e+00 : bf16
    %22 = vector.broadcast %cst_18 : bf16 to vector<1x16x4xbf16>
    %c0_19 = arith.constant 0 : index
    %c17 = arith.constant 17 : index
    %c0_20 = arith.constant 0 : index
    %c0_21 = arith.constant 0 : index
    %23 = vector.load %arg3[%c0_19, %c17, %c0_20, %c0_21] : memref<1x18x16x4xbf16, #tpu.memory_space<vmem>>, vector<1x1x16x4xbf16>
    %24 = vector.shape_cast %23 : vector<1x1x16x4xbf16> to vector<1x16x4xbf16>
    %25 = vector.shape_cast %22 : vector<1x16x4xbf16> to vector<1x1x16x4xbf16>
    tpu.vector_store %arg3[%c0_19, %c17, %c0_20, %c0_21], %25 {strides = array<i32>} : memref<1x18x16x4xbf16, #tpu.memory_space<vmem>>, vector<1x1x16x4xbf16>,
    return
  }
  func.func @transform_0(%arg0: i32) -> (i32, i32, i32, i32) {
    %c0_i32 = arith.constant 0 : i32
    %c0_i32_0 = arith.constant 0 : i32
    %c0_i32_1 = arith.constant 0 : i32
    %c0_i32_2 = arith.constant 0 : i32
    return %arg0, %c0_i32, %c0_i32_0, %c0_i32_1 : i32, i32, i32, i32
  }
  func.func @transform_1(%arg0: i32) -> (i32, i32) {
    %c0_i32 = arith.constant 0 : i32
    %c0_i32_0 = arith.constant 0 : i32
    %c0_i32_1 = arith.constant 0 : i32
    return %c0_i32, %c0_i32_0 : i32, i32
  }
  func.func @transform_2(%arg0: i32) -> (i32, i32, i32, i32) {
    %c0_i32 = arith.constant 0 : i32
    %c0_i32_0 = arith.constant 0 : i32
    %c0_i32_1 = arith.constant 0 : i32
    %c0_i32_2 = arith.constant 0 : i32
    return %arg0, %c0_i32, %c0_i32_0, %c0_i32_1 : i32, i32, i32, i32
  }
  func.func @transform_3(%arg0: i32) -> (i32, i32, i32) {
    %c0_i32 = arith.constant 0 : i32
    %c0_i32_0 = arith.constant 0 : i32
    %c0_i32_1 = arith.constant 0 : i32
    return %arg0, %c0_i32, %c0_i32_0 : i32, i32, i32
  }
}

</mosaic_0001>

<llo_original>
// kernel: tpu_custom_call.1
$region0: #{tpu_custom_call.1}
  #allocation0 [shape = 'u32[]', space=smem, size = 0x4, offset = 0x4, fixed_abs, tag = 'smem constant byte address 0x4 - core index']
  #allocation1 [shape = 'u32[144,128]{1,0:T(1,128)}', space=vmem, size = 0x12000, scoped, tag = 'internal scratch']
  %s0 = inlined_call_operand.hbm [shape: f32[2,16,16,16], index: 0, kind: input, shape index: {}]
  %s1 = inlined_call_operand.vmem [shape: bf16[16,4], index: 1, kind: input, shape index: {}]
  %s2 = inlined_call_operand.vmem [shape: bf16[2,18,16,4], index: 2, kind: output, shape index: {0}]
  %s3 = inlined_call_operand.hbm [shape: f32[2,2,4], index: 3, kind: output, shape index: {1}]
  %4 = xla_tuple %s2, %s3
  %s5 = sld [smem:[#allocation0]]
  $region53: #{tpu_custom_call.1} parent=0
    _
  %s7 = ssub.s32 1, %s5
  %s8 = scalar_select 0, %s7, %s5
  $region1: #{tpu_custom_call.1} parent=0
    #allocation2 [shape = 'u8[262144]{0}', space=vmem, size = 0x40000, scoped, tag = 'input window, operand 0']
    #allocation3 [shape = 's32[2]{0}', space=sflag, size = 0x8, scoped, tag = 'scoped memory for tpu_custom_call.1']
    #allocation4 [shape = 's32[2]{0}', space=sflag, size = 0x8, scoped, tag = 'scoped memory for tpu_custom_call.1']
    #allocation5 [shape = 'u8[2048]{0}', space=vmem, size = 0x800, scoped, tag = 'output window, operand 1']
    %9 = vsyncpa [#allocation3], 0
    %s10 = scalar_lea.sflag [#allocation3], 1
    %11 = vsyncpa %s10, 0
    %12 = vsyncpa [#allocation4], 0
    %s13 = scalar_lea.sflag [#allocation4], 1
    %14 = vsyncpa %s13, 0
    loop: start=0, step=1, limit=4
    $region2: #{tpu_custom_call.1} parent=1 // loop_pre_header
      _
    $region3: #{tpu_custom_call.1} parent=1 // loop_header
      %s16 = sphi 0, %s20
      %p17 = scmp.ge.s32.totalorder %s16, 4
      %s26 = sphi 0, %s28
      %s29 = sphi 0, %s26
      %s30 = sphi 0, %s29
      %s46 = sphi 0, %s30
      %s50 = sphi 0, %s50
      %s52 = sphi 0, %s50
      %s53 = sphi 0, %s52
      %s67 = sphi 0, %s53
      %s73 = sphi 0, %s75
      %s76 = sphi 0, %s73
      %s77 = sphi 0, %s76
      %s93 = sphi 0, %s77
      %s99 = sphi 0, %s101
      %s102 = sphi 0, %s99
      %s103 = sphi 0, %s102
      %s119 = sphi 0, %s103
    $region4: #{tpu_custom_call.1} parent=1 // loop_header_branch
      %19 = sbr.rel (%p17) target = $region8
    $region5: #{tpu_custom_call.1} parent=1 // loop_body
      %s21 = ssub.s32 %s16, 1
      %s22 = ssub.s32 %s16, 2
      %s23 = sadd.s32 %s16, 1
      %s24 = ssub.s32 %s16, %s23
      %p25 = scmp.eq.s32.totalorder %s24, 0
      %s27 = sadd.s32 %s26, 1
      %s28 = scalar_select %p25, %s26, %s27
      %p31 = pneg %p25
      %p32 = scmp.eq.s32.totalorder %s16, 1
      %p33 = por %p31, %p32
      %p34 = scmp.ne.s32.totalorder %s26, %s29
      %p35 = scmp.eq.s32.totalorder %s16, 0
      %p36 = por %p34, %p35
      %p37 = scmp.ne.s32.totalorder %s26, %s29
      %p38 = scmp.eq.s32.totalorder %s21, 1
      %p39 = por %p37, %p38
      %p40 = scmp.ne.s32.totalorder %s29, %s30
      %p41 = scmp.eq.s32.totalorder %s21, 0
      %p42 = por %p40, %p41
      %p43 = scmp.ne.s32.totalorder %s29, %s30
      %p44 = scmp.eq.s32.totalorder %s22, 1
      %p45 = por %p43, %p44
      %p47 = scmp.ne.s32.totalorder %s30, %s46
      %p48 = scmp.eq.s32.totalorder %s22, 0
      %p49 = por %p47, %p48
      %s51 = sadd.s32 %s50, 1
      %p54 = scmp.eq.s32.totalorder %s16, 1
      %p55 = scmp.ne.s32.totalorder %s50, %s52
      %p56 = scmp.eq.s32.totalorder %s16, 0
      %p57 = por %p55, %p56
      %p58 = scmp.ne.s32.totalorder %s50, %s52
      %p59 = scmp.eq.s32.totalorder %s21, 1
      %p60 = por %p58, %p59
      %p61 = scmp.ne.s32.totalorder %s52, %s53
      %p62 = scmp.eq.s32.totalorder %s21, 0
      %p63 = por %p61, %p62
      %p64 = scmp.ne.s32.totalorder %s52, %s53
      %p65 = scmp.eq.s32.totalorder %s22, 1
      %p66 = por %p64, %p65
      %p68 = scmp.ne.s32.totalorder %s53, %s67
      %p69 = scmp.eq.s32.totalorder %s22, 0
      %p70 = por %p68, %p69
      %s71 = ssub.s32 %s16, %s23
      %p72 = scmp.eq.s32.totalorder %s71, 0
      %s74 = sadd.s32 %s73, 1
      %s75 = scalar_select %p72, %s73, %s74
      %p78 = pneg %p72
      %p79 = scmp.eq.s32.totalorder %s16, 1
      %p80 = por %p78, %p79
      %p81 = scmp.ne.s32.totalorder %s73, %s76
      %p82 = scmp.eq.s32.totalorder %s16, 0
      %p83 = por %p81, %p82
      %p84 = scmp.ne.s32.totalorder %s73, %s76
      %p85 = scmp.eq.s32.totalorder %s21, 1
      %p86 = por %p84, %p85
      %p87 = scmp.ne.s32.totalorder %s76, %s77
      %p88 = scmp.eq.s32.totalorder %s21, 0
      %p89 = por %p87, %p88
      %p90 = scmp.ne.s32.totalorder %s76, %s77
      %p91 = scmp.eq.s32.totalorder %s22, 1
      %p92 = por %p90, %p91
      %p94 = scmp.ne.s32.totalorder %s77, %s93
      %p95 = scmp.eq.s32.totalorder %s22, 0
      %p96 = por %p94, %p95
      %s97 = ssub.s32 %s16, %s23
      %p98 = scmp.eq.s32.totalorder %s97, 0
      %s100 = sadd.s32 %s99, 1
      %s101 = scalar_select %p98, %s99, %s100
      %p104 = pneg %p98
      %p105 = scmp.eq.s32.totalorder %s16, 1
      %p106 = por %p104, %p105
      %p107 = scmp.ne.s32.totalorder %s99, %s102
      %p108 = scmp.eq.s32.totalorder %s16, 0
      %p109 = por %p107, %p108
      %p110 = scmp.ne.s32.totalorder %s99, %s102
      %p111 = scmp.eq.s32.totalorder %s21, 1
      %p112 = por %p110, %p111
      %p113 = scmp.ne.s32.totalorder %s102, %s103
      %p114 = scmp.eq.s32.totalorder %s21, 0
      %p115 = por %p113, %p114
      %p116 = scmp.ne.s32.totalorder %s102, %s103
      %p117 = scmp.eq.s32.totalorder %s22, 1
      %p118 = por %p116, %p117
      %p120 = scmp.ne.s32.totalorder %s103, %s119
      %p121 = scmp.eq.s32.totalorder %s22, 0
      %p122 = por %p120, %p121
      %p123 = scmp.le.s32.totalorder 1, %s16
      %p124 = scmp.lt.s32.totalorder %s16, 3
      %p125 = pnand %p123, %p124
      %p126 = pneg %p125
      // Predicated region
      $region9: #{tpu_custom_call.1} parent=5 // pred_check
        _
      $region10: #{tpu_custom_call.1} parent=5 // pred_check_branch
        %128 = sbr.rel (%p125) target = $region12
      $region11: #{tpu_custom_call.1} parent=5 // pred_region
        %s129 = ssub.s32 %s16, 1
        // Predicated region
        $region13: #{tpu_custom_call.1} parent=11 // pred_check
          %p130 = pneg %p63
        $region14: #{tpu_custom_call.1} parent=11 // pred_check_branch
          %132 = sbr.rel (%p130) target = $region16
        $region15: #{tpu_custom_call.1} parent=11 // pred_region
          _
        $region16: #{tpu_custom_call.1} parent=11 // pred_fallthru
          _
      $region12: #{tpu_custom_call.1} parent=5 // pred_fallthru
        _
      %p133 = scmp.lt.s32.totalorder %s16, 2
      // Predicated region
      $region17: #{tpu_custom_call.1} parent=5 // pred_check
        %p134 = pneg %p133
      $region18: #{tpu_custom_call.1} parent=5 // pred_check_branch
        %136 = sbr.rel (%p134) target = $region20
      $region19: #{tpu_custom_call.1} parent=5 // pred_region
        // Predicated region
        $region21: #{tpu_custom_call.1} parent=19 // pred_check
          %p137 = pneg %p36
        $region22: #{tpu_custom_call.1} parent=19 // pred_check_branch
          %139 = sbr.rel (%p137) target = $region24
        $region23: #{tpu_custom_call.1} parent=19 // pred_region
          %s140 = sand.u32 %s26, 1
          %s141 = scalar_lea.sflag [#allocation3], %s140
          %s142 = sand.u32 %s26, 1
          %s143 = smul.addr %s142, 256
          %s144 = scalar_lea.vmem [#allocation2], %s143
          %s146 = ssub.s32 4096, 4096
          %147 = vsyncadd %s141, %s146
          %s148 = smul.addr %s16, 32
          %s149 = smul.addr %s148, 128
          %s150 = scalar_lea.hbm %s0, %s149
          %s151 = sshll.u32 %s144, 4
          %s152 = int_to_ptr.vmem [resolvable:$true] %s151
          %157 = dma.hbm_to_vmem [thread:$0]  %s150, 4096, %s152, %s141, 128, 128, 8
        $region24: #{tpu_custom_call.1} parent=19 // pred_fallthru
          _
      $region20: #{tpu_custom_call.1} parent=5 // pred_fallthru
        _
      %p158 = scmp.le.s32.totalorder 1, %s16
      %p159 = scmp.lt.s32.totalorder %s16, 3
      %p160 = pnand %p158, %p159
      %p161 = pneg %p160
      // Predicated region
      $region25: #{tpu_custom_call.1} parent=5 // pred_check
        _
      $region26: #{tpu_custom_call.1} parent=5 // pred_check_branch
        %163 = sbr.rel (%p160) target = $region28
      $region27: #{tpu_custom_call.1} parent=5 // pred_region
        %s164 = ssub.s32 %s16, 1
        %s165 = sand.u32 %s29, 1
        %s166 = scalar_lea.sflag [#allocation3], %s165
        %s167 = sand.u32 %s29, 1
        %s168 = smul.addr %s167, 256
        %s169 = scalar_lea.vmem [#allocation2], %s168
        // Predicated region
        $region29: #{tpu_custom_call.1} parent=27 // pred_check
          %p170 = pneg %p42
        $region30: #{tpu_custom_call.1} parent=27 // pred_check_branch
          %172 = sbr.rel (%p170) target = $region32
        $region31: #{tpu_custom_call.1} parent=27 // pred_region
          %173 = dma.done %s166, 4096
        $region32: #{tpu_custom_call.1} parent=27 // pred_fallthru
          _
        %s174 = sand.u32 %s29, 1
        %s175 = scalar_lea.sflag [#allocation3], %s174
        %s176 = sand.u32 %s29, 1
        %s177 = smul.addr %s176, 256
        %s178 = scalar_lea.vmem [#allocation2], %s177
        %p179 = pneg %p42
        %p180 = pneg %p39
        %p181 = pneg %p63
        %p182 = pneg %p60
        %p183 = pneg %p89
        %p184 = pneg %p86
        %p185 = scmp.lt.s32.totalorder %s21, 1
        %s186 = scalar_select %p185, %s21, 1
        %s187 = smul.addr %s186, 36
        %s188 = smul.addr %s187, 4
        %s189 = scalar_lea.vmem %s2, %s188
        %p190 = pneg %p115
        %p191 = pneg %p112
        %s192 = sand.u32 %s102, 1
        %s193 = scalar_lea.sflag [#allocation4], %s192
        %s194 = sand.u32 %s102, 1
        %s195 = smul.addr %s194, 2
        %s196 = scalar_lea.vmem [#allocation5], %s195
        %p197 = scmp.lt.s32.totalorder %s21, 1
        %s198 = scalar_select %p197, %s21, 1
        %s199 = smul.addr %s198, 36
        %s200 = smul.addr %s199, 4
        %s201 = scalar_lea.vmem %s2, %s200
        %v203 = vld [vmem:[%s169] sm:$0xff]
        %v204 = vld [vmem:[%s169 + $0x8] sm:$0xff]
        %v205 = vld [vmem:[%s169 + $0x10] sm:$0xff]
        %v206 = vld [vmem:[%s169 + $0x18] sm:$0xff]
        %v207 = vld [vmem:[%s169 + $0x20] sm:$0xff]
        %v208 = vld [vmem:[%s169 + $0x28] sm:$0xff]
        %v209 = vld [vmem:[%s169 + $0x30] sm:$0xff]
        %v210 = vld [vmem:[%s169 + $0x38] sm:$0xff]
        %v211 = vld [vmem:[%s169 + $0x40] sm:$0xff]
        %v212 = vld [vmem:[%s169 + $0x48] sm:$0xff]
        %v213 = vld [vmem:[%s169 + $0x50] sm:$0xff]
        %v214 = vld [vmem:[%s169 + $0x58] sm:$0xff]
        %v215 = vld [vmem:[%s169 + $0x60] sm:$0xff]
        %v216 = vld [vmem:[%s169 + $0x68] sm:$0xff]
        %v217 = vld [vmem:[%s169 + $0x70] sm:$0xff]
        %v218 = vld [vmem:[%s169 + $0x78] sm:$0xff]
        %v219 = vld [vmem:[%s169 + $0x80] sm:$0xff]
        %v220 = vld [vmem:[%s169 + $0x88] sm:$0xff]
        %v221 = vld [vmem:[%s169 + $0x90] sm:$0xff]
        %v222 = vld [vmem:[%s169 + $0x98] sm:$0xff]
        %v223 = vld [vmem:[%s169 + $0xa0] sm:$0xff]
        %v224 = vld [vmem:[%s169 + $0xa8] sm:$0xff]
        %v225 = vld [vmem:[%s169 + $0xb0] sm:$0xff]
        %v226 = vld [vmem:[%s169 + $0xb8] sm:$0xff]
        %v227 = vld [vmem:[%s169 + $0xc0] sm:$0xff]
        %v228 = vld [vmem:[%s169 + $0xc8] sm:$0xff]
        %v229 = vld [vmem:[%s169 + $0xd0] sm:$0xff]
        %v230 = vld [vmem:[%s169 + $0xd8] sm:$0xff]
        %v231 = vld [vmem:[%s169 + $0xe0] sm:$0xff]
        %v232 = vld [vmem:[%s169 + $0xe8] sm:$0xff]
        %v233 = vld [vmem:[%s169 + $0xf0] sm:$0xff]
        %v234 = vld [vmem:[%s169 + $0xf8] sm:$0xff]
        %v235 = vpack.c.bf16 %v204, %v203
        %v236 = vpack.c.bf16 %v206, %v205
        %v237 = vpack.c.bf16 %v208, %v207
        %v238 = vpack.c.bf16 %v210, %v209
        %v239 = vpack.c.bf16 %v212, %v211
        %v240 = vpack.c.bf16 %v214, %v213
        %v241 = vpack.c.bf16 %v216, %v215
        %v242 = vpack.c.bf16 %v218, %v217
        %v243 = vpack.c.bf16 %v220, %v219
        %v244 = vpack.c.bf16 %v222, %v221
        %v245 = vpack.c.bf16 %v224, %v223
        %v246 = vpack.c.bf16 %v226, %v225
        %v247 = vpack.c.bf16 %v228, %v227
        %v248 = vpack.c.bf16 %v230, %v229
        %v249 = vpack.c.bf16 %v232, %v231
        %v250 = vpack.c.bf16 %v234, %v233
        %v251 = vld [vmem:[%s1] sm:$0xf]
        %v252 = vld [vmem:[%s1 + $0x4] sm:$0xf]
        %v255 = vunpack.c.l.b16 %v251
        %v256 = vunpack.c.l.b16 %v252
        %v257 = vpack.c.b16 %v256, %v255
        %vm259 = vcmask 130048
        %v261 = vsel %vm259, %v235, 0
        %v264 = vsel %vm259, %v236, 0
        %v267 = vsel %vm259, %v237, 0
        %v270 = vsel %vm259, %v238, 0
        %v273 = vsel %vm259, %v239, 0
        %v276 = vsel %vm259, %v240, 0
        %v279 = vsel %vm259, %v241, 0
        %v282 = vsel %vm259, %v242, 0
        %v285 = vsel %vm259, %v243, 0
        %v288 = vsel %vm259, %v244, 0
        %v291 = vsel %vm259, %v245, 0
        %v294 = vsel %vm259, %v246, 0
        %v297 = vsel %vm259, %v247, 0
        %v300 = vsel %vm259, %v248, 0
        %v303 = vsel %vm259, %v249, 0
        %v306 = vsel %vm259, %v250, 0
        %308 = vmatprep.subr.bf16.mxu0 0
        %309 = vmatpush1.bf16.msra.mxu0 0
        %310 = vmatprep.subr.bf16.mxu0 0
        %311 = vmatpush1.bf16.msra.mxu0 0
        %312 = vmatprep.subr.bf16.mxu0 0
        %313 = vmatpush1.bf16.msra.mxu0 0
        %314 = vmatprep.subr.bf16.mxu0 0
        %315 = vmatpush1.bf16.msra.mxu0 0
        %316 = vmatprep.subr.bf16.mxu0 0
        %317 = vmatpush1.bf16.msra.mxu0 0
        %318 = vmatprep.subr.bf16.mxu0 0
        %319 = vmatpush1.bf16.msra.mxu0 0
        %320 = vmatprep.subr.bf16.mxu0 0
        %321 = vmatpush1.bf16.msra.mxu0 0
        %322 = vmatprep.subr.bf16.mxu0 0
        %323 = vmatpush1.bf16.msra.mxu0 %v257
        %324 = vmatprep.subr.bf16.mxu0 0
        %325 = vmatpush2.bf16.msra.mxu0 0
        %326 = vmatprep.subr.bf16.mxu0 0
        %327 = vmatpush2.bf16.msra.mxu0 0
        %328 = vmatprep.subr.bf16.mxu0 0
        %329 = vmatpush2.bf16.msra.mxu0 0
        %330 = vmatprep.subr.bf16.mxu0 0
        %331 = vmatpush2.bf16.msra.mxu0 0
        %332 = vmatprep.subr.bf16.mxu0 0
        %333 = vmatpush2.bf16.msra.mxu0 0
        %334 = vmatprep.subr.bf16.mxu0 0
        %335 = vmatpush2.bf16.msra.mxu0 0
        %336 = vmatprep.subr.bf16.mxu0 0
        %337 = vmatpush2.bf16.msra.mxu0 0
        %338 = vmatprep.subr.bf16.mxu0 0
        %339 = vmatpush2.bf16.msra.mxu0 0
        %340 = vmatprep.mubr.bf16.mxu0 0
        %341 = vmatmul.mubr.bf16.gmra.mxu0 %v261
        %v342 = vpop.f32.mrf.mxu0
        %v343 = vadd.f32 0.0, %v342
        %v344 = vpop.f32.mrf.mxu0
        %v345 = vpop.f32.mrf.mxu0
        %v346 = vadd.f32 0.0, %v345
        %v347 = vpop.f32.mrf.mxu0
        %348 = vmatprep.mubr.bf16.mxu0 0
        %349 = vmatmul.mubr.bf16.gmra.mxu0 %v264
        %v350 = vpop.f32.mrf.mxu0
        %v351 = vadd.f32 0.0, %v350
        %v352 = vpop.f32.mrf.mxu0
        %v353 = vpop.f32.mrf.mxu0
        %v354 = vadd.f32 0.0, %v353
        %v355 = vpop.f32.mrf.mxu0
        %356 = vmatprep.mubr.bf16.mxu0 0
        %357 = vmatmul.mubr.bf16.gmra.mxu0 %v267
        %v358 = vpop.f32.mrf.mxu0
        %v359 = vadd.f32 0.0, %v358
        %v360 = vpop.f32.mrf.mxu0
        %v361 = vpop.f32.mrf.mxu0
        %v362 = vadd.f32 0.0, %v361
        %v363 = vpop.f32.mrf.mxu0
        %364 = vmatprep.mubr.bf16.mxu0 0
        %365 = vmatmul.mubr.bf16.gmra.mxu0 %v270
        %v366 = vpop.f32.mrf.mxu0
        %v367 = vadd.f32 0.0, %v366
        %v368 = vpop.f32.mrf.mxu0
        %v369 = vpop.f32.mrf.mxu0
        %v370 = vadd.f32 0.0, %v369
        %v371 = vpop.f32.mrf.mxu0
        %372 = vmatprep.mubr.bf16.mxu0 0
        %373 = vmatmul.mubr.bf16.gmra.mxu0 %v273
        %v374 = vpop.f32.mrf.mxu0
        %v375 = vadd.f32 0.0, %v374
        %v376 = vpop.f32.mrf.mxu0
        %v377 = vpop.f32.mrf.mxu0
        %v378 = vadd.f32 0.0, %v377
        %v379 = vpop.f32.mrf.mxu0
        %380 = vmatprep.mubr.bf16.mxu0 0
        %381 = vmatmul.mubr.bf16.gmra.mxu0 %v276
        %v382 = vpop.f32.mrf.mxu0
        %v383 = vadd.f32 0.0, %v382
        %v384 = vpop.f32.mrf.mxu0
        %v385 = vpop.f32.mrf.mxu0
        %v386 = vadd.f32 0.0, %v385
        %v387 = vpop.f32.mrf.mxu0
        %388 = vmatprep.mubr.bf16.mxu0 0
        %389 = vmatmul.mubr.bf16.gmra.mxu0 %v279
        %v390 = vpop.f32.mrf.mxu0
        %v391 = vadd.f32 0.0, %v390
        %v392 = vpop.f32.mrf.mxu0
        %v393 = vpop.f32.mrf.mxu0
        %v394 = vadd.f32 0.0, %v393
        %v395 = vpop.f32.mrf.mxu0
        %396 = vmatprep.mubr.bf16.mxu0 0
        %397 = vmatmul.mubr.bf16.gmra.mxu0 %v282
        %v398 = vpop.f32.mrf.mxu0
        %v399 = vadd.f32 0.0, %v398
        %v400 = vpop.f32.mrf.mxu0
        %v401 = vpop.f32.mrf.mxu0
        %v402 = vadd.f32 0.0, %v401
        %v403 = vpop.f32.mrf.mxu0
        %404 = vmatprep.mubr.bf16.mxu0 0
        %405 = vmatmul.mubr.bf16.gmra.mxu0 %v285
        %v406 = vpop.f32.mrf.mxu0
        %v407 = vadd.f32 0.0, %v406
        %v408 = vpop.f32.mrf.mxu0
        %v409 = vpop.f32.mrf.mxu0
        %v410 = vadd.f32 0.0, %v409
        %v411 = vpop.f32.mrf.mxu0
        %412 = vmatprep.mubr.bf16.mxu0 0
        %413 = vmatmul.mubr.bf16.gmra.mxu0 %v288
        %v414 = vpop.f32.mrf.mxu0
        %v415 = vadd.f32 0.0, %v414
        %v416 = vpop.f32.mrf.mxu0
        %v417 = vpop.f32.mrf.mxu0
        %v418 = vadd.f32 0.0, %v417
        %v419 = vpop.f32.mrf.mxu0
        %420 = vmatprep.mubr.bf16.mxu0 0
        %421 = vmatmul.mubr.bf16.gmra.mxu0 %v291
        %v422 = vpop.f32.mrf.mxu0
        %v423 = vadd.f32 0.0, %v422
        %v424 = vpop.f32.mrf.mxu0
        %v425 = vpop.f32.mrf.mxu0
        %v426 = vadd.f32 0.0, %v425
        %v427 = vpop.f32.mrf.mxu0
        %428 = vmatprep.mubr.bf16.mxu0 0
        %429 = vmatmul.mubr.bf16.gmra.mxu0 %v294
        %v430 = vpop.f32.mrf.mxu0
        %v431 = vadd.f32 0.0, %v430
        %v432 = vpop.f32.mrf.mxu0
        %v433 = vpop.f32.mrf.mxu0
        %v434 = vadd.f32 0.0, %v433
        %v435 = vpop.f32.mrf.mxu0
        %436 = vmatprep.mubr.bf16.mxu0 0
        %437 = vmatmul.mubr.bf16.gmra.mxu0 %v297
        %v438 = vpop.f32.mrf.mxu0
        %v439 = vadd.f32 0.0, %v438
        %v440 = vpop.f32.mrf.mxu0
        %v441 = vpop.f32.mrf.mxu0
        %v442 = vadd.f32 0.0, %v441
        %v443 = vpop.f32.mrf.mxu0
        %444 = vmatprep.mubr.bf16.mxu0 0
        %445 = vmatmul.mubr.bf16.gmra.mxu0 %v300
        %v446 = vpop.f32.mrf.mxu0
        %v447 = vadd.f32 0.0, %v446
        %v448 = vpop.f32.mrf.mxu0
        %v449 = vpop.f32.mrf.mxu0
        %v450 = vadd.f32 0.0, %v449
        %v451 = vpop.f32.mrf.mxu0
        %452 = vmatprep.mubr.bf16.mxu0 0
        %453 = vmatmul.mubr.bf16.gmra.mxu0 %v303
        %v454 = vpop.f32.mrf.mxu0
        %v455 = vadd.f32 0.0, %v454
        %v456 = vpop.f32.mrf.mxu0
        %v457 = vpop.f32.mrf.mxu0
        %v458 = vadd.f32 0.0, %v457
        %v459 = vpop.f32.mrf.mxu0
        %460 = vmatprep.mubr.bf16.mxu0 0
        %461 = vmatmul.mubr.bf16.gmra.mxu0 %v306
        %v462 = vpop.f32.mrf.mxu0
        %v463 = vadd.f32 0.0, %v462
        %v464 = vpop.f32.mrf.mxu0
        %v465 = vpop.f32.mrf.mxu0
        %v466 = vadd.f32 0.0, %v465
        %v467 = vpop.f32.mrf.mxu0
        %468 = vdwg.mxu0
        %vm469 = vcmask 31744
        %v470 = vsel %vm469, %v343, 0.0
        %v471 = vsel %vm469, %v346, 0.0
        %v472 = vadd.f32 %v470, %v471
        %v473 = vsel %vm469, %v351, 0.0
        %v474 = vadd.f32 %v472, %v473
        %v475 = vsel %vm469, %v354, 0.0
        %v476 = vadd.f32 %v474, %v475
        %v477 = vsel %vm469, %v359, 0.0
        %v478 = vadd.f32 %v476, %v477
        %v479 = vsel %vm469, %v362, 0.0
        %v480 = vadd.f32 %v478, %v479
        %v481 = vsel %vm469, %v367, 0.0
        %v482 = vadd.f32 %v480, %v481
        %v483 = vsel %vm469, %v370, 0.0
        %v484 = vadd.f32 %v482, %v483
        %v485 = vsel %vm469, %v375, 0.0
        %v486 = vadd.f32 %v484, %v485
        %v487 = vsel %vm469, %v378, 0.0
        %v488 = vadd.f32 %v486, %v487
        %v489 = vsel %vm469, %v383, 0.0
        %v490 = vadd.f32 %v488, %v489
        %v491 = vsel %vm469, %v386, 0.0
        %v492 = vadd.f32 %v490, %v491
        %v493 = vsel %vm469, %v391, 0.0
        %v494 = vadd.f32 %v492, %v493
        %v495 = vsel %vm469, %v394, 0.0
        %v496 = vadd.f32 %v494, %v495
        %v497 = vsel %vm469, %v399, 0.0
        %v498 = vadd.f32 %v496, %v497
        %v499 = vsel %vm469, %v402, 0.0
        %v500 = vadd.f32 %v498, %v499
        %v501 = vsel %vm469, %v407, 0.0
        %v502 = vadd.f32 %v500, %v501
        %v503 = vsel %vm469, %v410, 0.0
        %v504 = vadd.f32 %v502, %v503
        %v505 = vsel %vm469, %v415, 0.0
        %v506 = vadd.f32 %v504, %v505
        %v507 = vsel %vm469, %v418, 0.0
        %v508 = vadd.f32 %v506, %v507
        %v509 = vsel %vm469, %v423, 0.0
        %v510 = vadd.f32 %v508, %v509
        %v511 = vsel %vm469, %v426, 0.0
        %v512 = vadd.f32 %v510, %v511
        %v513 = vsel %vm469, %v431, 0.0
        %v514 = vadd.f32 %v512, %v513
        %v515 = vsel %vm469, %v434, 0.0
        %v516 = vadd.f32 %v514, %v515
        %v517 = vsel %vm469, %v439, 0.0
        %v518 = vadd.f32 %v516, %v517
        %v519 = vsel %vm469, %v442, 0.0
        %v520 = vadd.f32 %v518, %v519
        %v521 = vsel %vm469, %v447, 0.0
        %v522 = vadd.f32 %v520, %v521
        %v523 = vsel %vm469, %v450, 0.0
        %v524 = vadd.f32 %v522, %v523
        %v525 = vsel %vm469, %v455, 0.0
        %v526 = vadd.f32 %v524, %v525
        %v527 = vsel %vm469, %v458, 0.0
        %v528 = vadd.f32 %v526, %v527
        %v529 = vsel %vm469, %v463, 0.0
        %v530 = vadd.f32 %v528, %v529
        %v531 = vsel %vm469, %v466, 0.0
        %v532 = vadd.f32 %v530, %v531
        %v533 = vrot.slane %v532, 4
        %v534 = vadd.f32 %v532, %v533
        %v535 = vrot.slane %v534, 2
        %v536 = vadd.f32 %v534, %v535
        %v537 = vrot.slane %v536, 1
        %v538 = vadd.f32 %v536, %v537
        %v539 = vmul.f32 %v343, %v343
        %v540 = vmul.f32 %v346, %v346
        %v541 = vmul.f32 %v351, %v351
        %v542 = vmul.f32 %v354, %v354
        %v543 = vmul.f32 %v359, %v359
        %v544 = vmul.f32 %v362, %v362
        %v545 = vmul.f32 %v367, %v367
        %v546 = vmul.f32 %v370, %v370
        %v547 = vmul.f32 %v375, %v375
        %v548 = vmul.f32 %v378, %v378
        %v549 = vmul.f32 %v383, %v383
        %v550 = vmul.f32 %v386, %v386
        %v551 = vmul.f32 %v391, %v391
        %v552 = vmul.f32 %v394, %v394
        %v553 = vmul.f32 %v399, %v399
        %v554 = vmul.f32 %v402, %v402
        %v555 = vmul.f32 %v407, %v407
        %v556 = vmul.f32 %v410, %v410
        %v557 = vmul.f32 %v415, %v415
        %v558 = vmul.f32 %v418, %v418
        %v559 = vmul.f32 %v423, %v423
        %v560 = vmul.f32 %v426, %v426
        %v561 = vmul.f32 %v431, %v431
        %v562 = vmul.f32 %v434, %v434
        %v563 = vmul.f32 %v439, %v439
        %v564 = vmul.f32 %v442, %v442
        %v565 = vmul.f32 %v447, %v447
        %v566 = vmul.f32 %v450, %v450
        %v567 = vmul.f32 %v455, %v455
        %v568 = vmul.f32 %v458, %v458
        %v569 = vmul.f32 %v463, %v463
        %v570 = vmul.f32 %v466, %v466
        %v571 = vsel %vm469, %v539, 0.0
        %v572 = vsel %vm469, %v540, 0.0
        %v573 = vadd.f32 %v571, %v572
        %v574 = vsel %vm469, %v541, 0.0
        %v575 = vadd.f32 %v573, %v574
        %v576 = vsel %vm469, %v542, 0.0
        %v577 = vadd.f32 %v575, %v576
        %v578 = vsel %vm469, %v543, 0.0
        %v579 = vadd.f32 %v577, %v578
        %v580 = vsel %vm469, %v544, 0.0
        %v581 = vadd.f32 %v579, %v580
        %v582 = vsel %vm469, %v545, 0.0
        %v583 = vadd.f32 %v581, %v582
        %v584 = vsel %vm469, %v546, 0.0
        %v585 = vadd.f32 %v583, %v584
        %v586 = vsel %vm469, %v547, 0.0
        %v587 = vadd.f32 %v585, %v586
        %v588 = vsel %vm469, %v548, 0.0
        %v589 = vadd.f32 %v587, %v588
        %v590 = vsel %vm469, %v549, 0.0
        %v591 = vadd.f32 %v589, %v590
        %v592 = vsel %vm469, %v550, 0.0
        %v593 = vadd.f32 %v591, %v592
        %v594 = vsel %vm469, %v551, 0.0
        %v595 = vadd.f32 %v593, %v594
        %v596 = vsel %vm469, %v552, 0.0
        %v597 = vadd.f32 %v595, %v596
        %v598 = vsel %vm469, %v553, 0.0
        %v599 = vadd.f32 %v597, %v598
        %v600 = vsel %vm469, %v554, 0.0
        %v601 = vadd.f32 %v599, %v600
        %v602 = vsel %vm469, %v555, 0.0
        %v603 = vadd.f32 %v601, %v602
        %v604 = vsel %vm469, %v556, 0.0
        %v605 = vadd.f32 %v603, %v604
        %v606 = vsel %vm469, %v557, 0.0
        %v607 = vadd.f32 %v605, %v606
        %v608 = vsel %vm469, %v558, 0.0
        %v609 = vadd.f32 %v607, %v608
        %v610 = vsel %vm469, %v559, 0.0
        %v611 = vadd.f32 %v609, %v610
        %v612 = vsel %vm469, %v560, 0.0
        %v613 = vadd.f32 %v611, %v612
        %v614 = vsel %vm469, %v561, 0.0
        %v615 = vadd.f32 %v613, %v614
        %v616 = vsel %vm469, %v562, 0.0
        %v617 = vadd.f32 %v615, %v616
        %v618 = vsel %vm469, %v563, 0.0
        %v619 = vadd.f32 %v617, %v618
        %v620 = vsel %vm469, %v564, 0.0
        %v621 = vadd.f32 %v619, %v620
        %v622 = vsel %vm469, %v565, 0.0
        %v623 = vadd.f32 %v621, %v622
        %v624 = vsel %vm469, %v566, 0.0
        %v625 = vadd.f32 %v623, %v624
        %v626 = vsel %vm469, %v567, 0.0
        %v627 = vadd.f32 %v625, %v626
        %v628 = vsel %vm469, %v568, 0.0
        %v629 = vadd.f32 %v627, %v628
        %v630 = vsel %vm469, %v569, 0.0
        %v631 = vadd.f32 %v629, %v630
        %v632 = vsel %vm469, %v570, 0.0
        %v633 = vadd.f32 %v631, %v632
        %v634 = vrot.slane %v633, 4
        %v635 = vadd.f32 %v633, %v634
        %v636 = vrot.slane %v635, 2
        %v637 = vadd.f32 %v635, %v636
        %v638 = vrot.slane %v637, 1
        %v639 = vadd.f32 %v637, %v638
        %vm640 = vcmask 1040384
        %v641 = vsel %vm640, %v538, %v639
        %vm642 = vcmask 25600
        %643 = vst.msk [vmem:[%s196] sm:$0x3] %vm642, %v641
        %v644 = vpack.c.bf16 %v346, %v343
        %v645 = vpack.c.bf16 %v354, %v351
        %v646 = vpack.c.bf16 %v362, %v359
        %v647 = vpack.c.bf16 %v370, %v367
        %v648 = vpack.c.bf16 %v378, %v375
        %v649 = vpack.c.bf16 %v386, %v383
        %v650 = vpack.c.bf16 %v394, %v391
        %v651 = vpack.c.bf16 %v402, %v399
        %v652 = vpack.c.bf16 %v410, %v407
        %v653 = vpack.c.bf16 %v418, %v415
        %v654 = vpack.c.bf16 %v426, %v423
        %v655 = vpack.c.bf16 %v434, %v431
        %v656 = vpack.c.bf16 %v442, %v439
        %v657 = vpack.c.bf16 %v450, %v447
        %v658 = vpack.c.bf16 %v458, %v455
        %v659 = vpack.c.bf16 %v466, %v463
        %v676 = vunpack.c.l.b16 %v644
        %v677 = vunpack.c.h.b16 %v644
        %v678 = vunpack.c.l.b16 %v645
        %v679 = vunpack.c.h.b16 %v645
        %v680 = vunpack.c.l.b16 %v646
        %v681 = vunpack.c.h.b16 %v646
        %v682 = vunpack.c.l.b16 %v647
        %v683 = vunpack.c.h.b16 %v647
        %v684 = vunpack.c.l.b16 %v648
        %v685 = vunpack.c.h.b16 %v648
        %v686 = vunpack.c.l.b16 %v649
        %v687 = vunpack.c.h.b16 %v649
        %v688 = vunpack.c.l.b16 %v650
        %v689 = vunpack.c.h.b16 %v650
        %v690 = vunpack.c.l.b16 %v651
        %v691 = vunpack.c.h.b16 %v651
        %v692 = vunpack.c.l.b16 %v652
        %v693 = vunpack.c.h.b16 %v652
        %v694 = vunpack.c.l.b16 %v653
        %v695 = vunpack.c.h.b16 %v653
        %v696 = vunpack.c.l.b16 %v654
        %v697 = vunpack.c.h.b16 %v654
        %v698 = vunpack.c.l.b16 %v655
        %v699 = vunpack.c.h.b16 %v655
        %v700 = vunpack.c.l.b16 %v656
        %v701 = vunpack.c.h.b16 %v656
        %v702 = vunpack.c.l.b16 %v657
        %v703 = vunpack.c.h.b16 %v657
        %v704 = vunpack.c.l.b16 %v658
        %v705 = vunpack.c.h.b16 %v658
        %v706 = vunpack.c.l.b16 %v659
        %v707 = vunpack.c.h.b16 %v659
        %v708 = vpack.c.b16 %v676, %v676
        %v709 = vpack.c.b16 %v677, %v677
        %v710 = vpack.c.b16 %v678, %v678
        %v711 = vpack.c.b16 %v679, %v679
        %v712 = vpack.c.b16 %v680, %v680
        %v713 = vpack.c.b16 %v681, %v681
        %v714 = vpack.c.b16 %v682, %v682
        %v715 = vpack.c.b16 %v683, %v683
        %v716 = vpack.c.b16 %v684, %v684
        %v717 = vpack.c.b16 %v685, %v685
        %v718 = vpack.c.b16 %v686, %v686
        %v719 = vpack.c.b16 %v687, %v687
        %v720 = vpack.c.b16 %v688, %v688
        %v721 = vpack.c.b16 %v689, %v689
        %v722 = vpack.c.b16 %v690, %v690
        %v723 = vpack.c.b16 %v691, %v691
        %v724 = vpack.c.b16 %v692, %v692
        %v725 = vpack.c.b16 %v693, %v693
        %v726 = vpack.c.b16 %v694, %v694
        %v727 = vpack.c.b16 %v695, %v695
        %v728 = vpack.c.b16 %v696, %v696
        %v729 = vpack.c.b16 %v697, %v697
        %v730 = vpack.c.b16 %v698, %v698
        %v731 = vpack.c.b16 %v699, %v699
        %v732 = vpack.c.b16 %v700, %v700
        %v733 = vpack.c.b16 %v701, %v701
        %v734 = vpack.c.b16 %v702, %v702
        %v735 = vpack.c.b16 %v703, %v703
        %v736 = vpack.c.b16 %v704, %v704
        %v737 = vpack.c.b16 %v705, %v705
        %v738 = vpack.c.b16 %v706, %v706
        %v739 = vpack.c.b16 %v707, %v707
        %s772 = scalar_lea.vmem %s201, 8
        %vm773 = vcmask 27648
        %774 = vst.msk [vmem:[%s772] sm:$0xf] %vm773, %v708
        %775 = vst.msk [vmem:[%s772 + $0x4] sm:$0xf] %vm773, %v709
        %776 = vst.msk [vmem:[%s772 + $0x8] sm:$0xf] %vm773, %v710
        %777 = vst.msk [vmem:[%s772 + $0xc] sm:$0xf] %vm773, %v711
        %778 = vst.msk [vmem:[%s772 + $0x10] sm:$0xf] %vm773, %v712
        %779 = vst.msk [vmem:[%s772 + $0x14] sm:$0xf] %vm773, %v713
        %780 = vst.msk [vmem:[%s772 + $0x18] sm:$0xf] %vm773, %v714
        %781 = vst.msk [vmem:[%s772 + $0x1c] sm:$0xf] %vm773, %v715
        %782 = vst.msk [vmem:[%s772 + $0x20] sm:$0xf] %vm773, %v716
        %783 = vst.msk [vmem:[%s772 + $0x24] sm:$0xf] %vm773, %v717
        %784 = vst.msk [vmem:[%s772 + $0x28] sm:$0xf] %vm773, %v718
        %785 = vst.msk [vmem:[%s772 + $0x2c] sm:$0xf] %vm773, %v719
        %786 = vst.msk [vmem:[%s772 + $0x30] sm:$0xf] %vm773, %v720
        %787 = vst.msk [vmem:[%s772 + $0x34] sm:$0xf] %vm773, %v721
        %788 = vst.msk [vmem:[%s772 + $0x38] sm:$0xf] %vm773, %v722
        %789 = vst.msk [vmem:[%s772 + $0x3c] sm:$0xf] %vm773, %v723
        %790 = vst.msk [vmem:[%s772 + $0x40] sm:$0xf] %vm773, %v724
        %791 = vst.msk [vmem:[%s772 + $0x44] sm:$0xf] %vm773, %v725
        %792 = vst.msk [vmem:[%s772 + $0x48] sm:$0xf] %vm773, %v726
        %793 = vst.msk [vmem:[%s772 + $0x4c] sm:$0xf] %vm773, %v727
        %794 = vst.msk [vmem:[%s772 + $0x50] sm:$0xf] %vm773, %v728
        %795 = vst.msk [vmem:[%s772 + $0x54] sm:$0xf] %vm773, %v729
        %796 = vst.msk [vmem:[%s772 + $0x58] sm:$0xf] %vm773, %v730
        %797 = vst.msk [vmem:[%s772 + $0x5c] sm:$0xf] %vm773, %v731
        %798 = vst.msk [vmem:[%s772 + $0x60] sm:$0xf] %vm773, %v732
        %799 = vst.msk [vmem:[%s772 + $0x64] sm:$0xf] %vm773, %v733
        %800 = vst.msk [vmem:[%s772 + $0x68] sm:$0xf] %vm773, %v734
        %801 = vst.msk [vmem:[%s772 + $0x6c] sm:$0xf] %vm773, %v735
        %802 = vst.msk [vmem:[%s772 + $0x70] sm:$0xf] %vm773, %v736
        %803 = vst.msk [vmem:[%s772 + $0x74] sm:$0xf] %vm773, %v737
        %804 = vst.msk [vmem:[%s772 + $0x78] sm:$0xf] %vm773, %v738
        %805 = vst.msk [vmem:[%s772 + $0x7c] sm:$0xf] %vm773, %v739
        %806 = vst.msk [vmem:[%s201] sm:$0xf] %vm773, 0
        %807 = vst.msk [vmem:[%s201 + $0x4] sm:$0xf] %vm773, 0
        %s808 = scalar_lea.vmem %s201, 136
        %809 = vst.msk [vmem:[%s808] sm:$0xf] %vm773, 0
        %810 = vst.msk [vmem:[%s808 + $0x4] sm:$0xf] %vm773, 0
        %p811 = scmp.lt.s32.totalorder %s21, 1
        %s812 = scalar_select %p811, %s21, 1
        %s813 = smul.addr %s812, 36
        %s814 = smul.addr %s813, 4
        %s815 = scalar_lea.vmem %s2, %s814
        %s816 = sand.u32 %s102, 1
        %s817 = scalar_lea.sflag [#allocation4], %s816
        %s818 = sand.u32 %s102, 1
        %s819 = smul.addr %s818, 2
        %s820 = scalar_lea.vmem [#allocation5], %s819
        // Predicated region
        $region33: #{tpu_custom_call.1} parent=27 // pred_check
          %p821 = pneg %p86
        $region34: #{tpu_custom_call.1} parent=27 // pred_check_branch
          %823 = sbr.rel (%p821) target = $region36
        $region35: #{tpu_custom_call.1} parent=27 // pred_region
          _
        $region36: #{tpu_custom_call.1} parent=27 // pred_fallthru
          _
        // Predicated region
        $region37: #{tpu_custom_call.1} parent=27 // pred_check
          %p824 = pneg %p112
        $region38: #{tpu_custom_call.1} parent=27 // pred_check_branch
          %826 = sbr.rel (%p824) target = $region40
        $region39: #{tpu_custom_call.1} parent=27 // pred_region
          %s828 = ssub.s32 32, 32
          %829 = vsyncadd %s817, %s828
          %s830 = smul.addr %s21, 32
          %s831 = scalar_lea.hbm %s3, %s830
          %s833 = sshll.u32 %s820, 4
          %s834 = int_to_ptr.vmem [resolvable:$true] %s833
          %836 = dma.vmem_to_hbm [thread:$0]  %s834, 32, %s831, %s817
        $region40: #{tpu_custom_call.1} parent=27 // pred_fallthru
          _
      $region28: #{tpu_custom_call.1} parent=5 // pred_fallthru
        _
      %p837 = scmp.le.s32.totalorder 2, %s16
      // Predicated region
      $region41: #{tpu_custom_call.1} parent=5 // pred_check
        %p838 = pneg %p837
      $region42: #{tpu_custom_call.1} parent=5 // pred_check_branch
        %840 = sbr.rel (%p838) target = $region44
      $region43: #{tpu_custom_call.1} parent=5 // pred_region
        %s841 = ssub.s32 %s16, 2
        // Predicated region
        $region45: #{tpu_custom_call.1} parent=43 // pred_check
          %p842 = pneg %p92
        $region46: #{tpu_custom_call.1} parent=43 // pred_check_branch
          %844 = sbr.rel (%p842) target = $region48
        $region47: #{tpu_custom_call.1} parent=43 // pred_region
          %p845 = scmp.lt.s32.totalorder %s22, 1
          %s846 = scalar_select %p845, %s22, 1
          %s847 = smul.addr %s846, 36
          %s848 = smul.addr %s847, 4
          %s849 = scalar_lea.vmem %s2, %s848
        $region48: #{tpu_custom_call.1} parent=43 // pred_fallthru
          _
        // Predicated region
        $region49: #{tpu_custom_call.1} parent=43 // pred_check
          %p850 = pneg %p118
        $region50: #{tpu_custom_call.1} parent=43 // pred_check_branch
          %852 = sbr.rel (%p850) target = $region52
        $region51: #{tpu_custom_call.1} parent=43 // pred_region
          %s853 = sand.u32 %s103, 1
          %s854 = scalar_lea.sflag [#allocation4], %s853
          %s855 = sand.u32 %s103, 1
          %s856 = smul.addr %s855, 2
          %s857 = scalar_lea.vmem [#allocation5], %s856
          %858 = dma.done %s854, 32
        $region52: #{tpu_custom_call.1} parent=43 // pred_fallthru
          _
      $region44: #{tpu_custom_call.1} parent=5 // pred_fallthru
        _
    $region6: #{tpu_custom_call.1} parent=1 // loop_footer
      %s20 = sadd.s32 1, %s16
    $region7: #{tpu_custom_call.1} parent=1 // loop_footer_branch
      %15 = sbr.rel target = $region3
    $region8: #{tpu_custom_call.1} parent=1 // loop_exit
      _
    %859 = vsyncpa [#allocation3], 1
    %s860 = scalar_lea.sflag [#allocation3], 1
    %861 = vsyncpa %s860, 1
    %862 = vsyncpa [#allocation4], 1
    %s863 = scalar_lea.sflag [#allocation4], 1
    %864 = vsyncpa %s863, 1

</llo_original>
